<compile_context>
chip_gen: v7x
topology: tpu7x:2x2x1
jax: 0.10.0
libtpu: 0.0.40
codegen_flags: <defaults>
</compile_context>

<pallas_src>
import functools
import math

import jax
import jax.numpy as jnp
from jax.experimental import pallas as pl
from jax.experimental.pallas import tpu as pltpu

LANES = 128
_MIB = 1024 * 1024


def _cdiv(a, b):
    return -(-a // b)


def _round_up(x, m):
    return ((x + m - 1) // m) * m


def _vmem_plan():
    """Returns (total pipeline byte budget, vmem_limit_bytes) per generation."""
    try:
        phys = int(pltpu.get_tpu_info().vmem_capacity_bytes)
    except Exception:
        phys = 64 * _MIB  # conservative default
    if phys >= 128 * _MIB:            # v5e / v6e (128 MiB physical VMEM)
        return 16 * _MIB, 64 * _MIB
    return 8 * _MIB, 32 * _MIB        # v7x (64 MiB physical per TensorCore)


def _plan_rows(R, max_rows, sub, other_steps):
    """Pick a block row count over an axis of length R (balanced blocks)."""
    if R <= max_rows:
        block, nb = R, 1              # full axis -> always layout-legal
    else:
        nb = _cdiv(R, max_rows)
        block = _round_up(_cdiv(R, nb), sub)   # balanced, sublane aligned
        nb = _cdiv(R, block)
    # Guarantee >= 2 total grid steps when there is enough work so the
    # "parallel" axes can shard across v7x's two TensorCores.
    if other_steps * nb < 2 and R >= 2 * sub:
        block = _round_up(_cdiv(R, 2), sub)
        nb = _cdiv(R, block)
    return block, nb


def _spatially_constant(shape, nd):
    aligned = (1,) * (nd - len(shape)) + tuple(shape)
    return aligned[-1] == 1 and aligned[-2] == 1


def _sat_fast_kernel(a_ref, c_ref, d_ref, p_ref, out_ref, *, s_sat, s_res):
    """a/c/d are (P,) SMEM vectors; p_ref/out_ref are (1, block_rows, 128)."""
    plane = pl.program_id(0)
    a = a_ref[plane]                  # scalar van Genuchten alpha
    c = c_ref[plane]                  # +1 even-integer n, -1 odd-integer n
    d = d_ref[plane]                  # 1.0 -> n non-integer (NaN -> 1.0 branch)

    p = p_ref[...].astype(jnp.float32)
    base = 1.0 - a * p
    t = (s_sat - s_res) / base        # exact: base>0 => sgn(x)*|x|**(-1/n) == 1/base
    pos = jnp.clip(t + s_res, 0.0, 1.0)
    neg_int = jnp.clip(s_res - c * t, 0.0, 1.0)      # base<0, integer n
    neg = jnp.where(d > 0.5, jnp.float32(1.0), neg_int)
    sat = jnp.where(base > 0.0, pos,
                    jnp.where(base < 0.0, neg, jnp.float32(1.0)))
    out_ref[...] = sat.astype(out_ref.dtype)


def _sat_general_kernel(p_ref, a_ref, n_ref, out_ref, *, s_sat, s_res):
    """Spatially varying a / n: everything streamed as (block_rows, 128)."""
    p = p_ref[...].astype(jnp.float32)
    a = a_ref[...].astype(jnp.float32)
    n = n_ref[...].astype(jnp.float32)

    base = 1.0 - a * p
    t = (s_sat - s_res) / base
    pos = jnp.clip(t + s_res, 0.0, 1.0)

    n_floor = jnp.floor(n)
    is_int = n == n_floor
    parity = n_floor - 2.0 * jnp.floor(n_floor * 0.5)
    sgn = jnp.where(parity != 0.0, jnp.float32(-1.0), jnp.float32(1.0))
    neg_int = jnp.clip(s_res - sgn * t, 0.0, 1.0)
    neg = jnp.where(is_int, neg_int, jnp.float32(1.0))

    sat = jnp.where(base > 0.0, pos,
                    jnp.where(base < 0.0, neg, jnp.float32(1.0)))
    out_ref[...] = sat.astype(out_ref.dtype)


def saturation_head(pressure, a, n, s_sat=1.0, s_res=0.0001):
    """JAX/Pallas equivalent of SaturationHead.forward (assumes n != 0)."""
    pressure = jnp.asarray(pressure)
    a = jnp.asarray(a)
    n = jnp.asarray(n)
    s_sat = float(s_sat)
    s_res = float(s_res)

    bshape = jnp.broadcast_shapes(pressure.shape, a.shape, n.shape)
    nd = len(bshape)
    total = math.prod(bshape)

    res_dtype = jnp.result_type(pressure.dtype, a.dtype, n.dtype)
    if res_dtype == jnp.bfloat16:
        stream_dtype = out_dtype = jnp.bfloat16
    else:
        stream_dtype = out_dtype = jnp.float32
    itemsize = jnp.dtype(stream_dtype).itemsize
    sub = 16 if itemsize == 2 else 8

    if total == 0:
        return jnp.zeros(bshape, out_dtype)

    if nd >= 2:
        plane_shape = bshape[:-2]
        S = bshape[-2] * bshape[-1]
    else:
        plane_shape = ()
        S = total
    P = max(math.prod(plane_shape), 1)
    S_pad = _round_up(S, LANES)
    R = S_pad // LANES

    budget, vmem_limit = _vmem_plan()

    # ---- shared slab helpers (lane pad only when strictly necessary) -------
    def _pad_lanes(x2):  # x2: (P, S)
        if S_pad != S:
            x2 = jnp.pad(x2, ((0, 0), (0, S_pad - S)), constant_values=1)
        return x2

    p_full = pressure.astype(stream_dtype) if pressure.dtype != stream_dtype else pressure
    if p_full.shape != bshape:
        p_full = jnp.broadcast_to(p_full, bshape)

    params_const = (nd >= 2
                    and _spatially_constant(a.shape, nd)
                    and _spatially_constant(n.shape, nd))
    # Per-plane stepping is only worthwhile if planes are big enough (or there
    # are few of them); otherwise the general streaming path with big blocks
    # amortizes the per-grid-step overhead better.
    use_fast = params_const and (R >= 128 or P <= 8)

    if use_fast:
        # ---------------- fast path: per-plane scalars in SMEM --------------
        a_pl = jnp.broadcast_to(a.astype(jnp.float32),
                                plane_shape + (1, 1)).reshape(P)
        n_pl = jnp.broadcast_to(n.astype(jnp.float32),
                                plane_shape + (1, 1)).reshape(P)
        n_floor = jnp.floor(n_pl)
        is_int = n_pl == n_floor
        parity = n_floor - 2.0 * jnp.floor(n_floor * 0.5)
        c_pl = jnp.where(parity != 0.0, -1.0, 1.0).astype(jnp.float32)
        d_pl = jnp.where(is_int, 0.0, 1.0).astype(jnp.float32)

        p_slab = _pad_lanes(p_full.reshape(P, S)).reshape(P, R, LANES)

        per_buf = budget // (2 * 2)                 # p + out, double buffered
        max_rows = max((per_buf // (LANES * itemsize)) // sub * sub, sub)
        block_rows, nb = _plan_rows(R, max_rows, sub, other_steps=P)

        data_spec = pl.BlockSpec((1, block_rows, LANES),
                                 lambda pi, bi: (pi, bi, 0))
        smem_spec = pl.BlockSpec(memory_space=pltpu.MemorySpace.SMEM)
        elems = P * R * LANES

        out_slab = pl.pallas_call(
            functools.partial(_sat_fast_kernel, s_sat=s_sat, s_res=s_res),
            out_shape=jax.ShapeDtypeStruct((P, R, LANES), out_dtype),
            grid_spec=pltpu.PrefetchScalarGridSpec(
                num_scalar_prefetch=0,
                grid=(P, nb),
                in_specs=[smem_spec, smem_spec, smem_spec, data_spec],
                out_specs=data_spec,
            ),
            compiler_params=pltpu.CompilerParams(
                dimension_semantics=("parallel", "parallel"),
                vmem_limit_bytes=vmem_limit,
            ),
            cost_estimate=pl.CostEstimate(
                flops=12 * elems,
                transcendentals=0,
                bytes_accessed=2 * elems * itemsize + 12 * P,
            ),
        )(a_pl, c_pl, d_pl, p_slab)
    else:
        # ---------------- general path: stream a and n slabs ----------------
        a_full = jnp.broadcast_to(a.astype(stream_dtype), bshape)
        n_full = jnp.broadcast_to(n.astype(stream_dtype), bshape)

        def _flat(x):
            return _pad_lanes(x.reshape(P, S)).reshape(P * R, LANES)

        p_slab = _flat(p_full)
        a_slab = _flat(a_full)
        n_slab = _flat(n_full)
        rows = P * R

        per_buf = budget // (4 * 2)                 # p, a, n, out double buffered
        max_rows = max((per_buf // (LANES * itemsize)) // sub * sub, sub)
        block_rows, nb = _plan_rows(rows, max_rows, sub, other_steps=1)

        spec = pl.BlockSpec((block_rows, LANES), lambda i: (i, 0))
        elems = rows * LANES

        out_slab = pl.pallas_call(
            functools.partial(_sat_general_kernel, s_sat=s_sat, s_res=s_res),
            out_shape=jax.ShapeDtypeStruct((rows, LANES), out_dtype),
            grid_spec=pltpu.PrefetchScalarGridSpec(
                num_scalar_prefetch=0,
                grid=(nb,),
                in_specs=[spec, spec, spec],
                out_specs=spec,
            ),
            compiler_params=pltpu.CompilerParams(
                dimension_semantics=("parallel",),
                vmem_limit_bytes=vmem_limit,
            ),
            cost_estimate=pl.CostEstimate(
                flops=18 * elems,
                transcendentals=0,
                bytes_accessed=4 * elems * itemsize,
            ),
        )(p_slab, a_slab, n_slab)

    out = out_slab.reshape(P, S_pad)
    if S_pad != S:
        out = out[:, :S]
    return out.reshape(bshape).astype(out_dtype)


def _reference(pressure, a, n, s_sat=1.0, s_res=0.0001):
    """Faithful f32 transcription of the torch forward, including torch.pow's
    handling of negative bases with integer-valued exponents."""
    p = jnp.asarray(pressure, jnp.float32)
    a = jnp.asarray(a, jnp.float32)
    n = jnp.asarray(n, jnp.float32)
    base = 1.0 - a * p

    n_floor = jnp.floor(n)
    is_int = n == n_floor
    parity = n_floor - 2.0 * jnp.floor(n_floor * 0.5)
    sign_int = jnp.where(parity != 0.0, -1.0, 1.0)
    mag = jnp.abs(base) ** n
    x_neg = jnp.where(is_int, sign_int * mag, jnp.nan)
    x = jnp.where(base >= 0.0, jnp.power(jnp.maximum(base, 0.0), n), x_neg)

    sgn_x = jnp.sign(x)
    scaled_x = jnp.abs(x) ** (-1.0 / n)
    sat = (s_sat - s_res) * (sgn_x * scaled_x) + s_res
    sat = jnp.clip(sat, 0.0, 1.0)
    sat = jnp.where(jnp.isnan(sat), 1.0, sat)
    return sat


if __name__ == "__main__":
    key = jax.random.PRNGKey(0)
    k1, k2, k3, k4, k5 = jax.random.split(key, 5)

    # Test 1: per-channel a/n (fast path, f32), with exact integer n values to
    # exercise the base < 0 integer-exponent branches.
    B, C, H, W = 2, 4, 16, 16
    pressure = jax.random.uniform(k1, (B, C, H, W), minval=-5.0, maxval=3.0)
    a = jax.random.uniform(k2, (1, C, 1, 1), minval=0.5, maxval=3.5)
    n = jnp.array([1.7, 2.0, 3.0, 2.4], jnp.float32).reshape(1, C, 1, 1)

    out = jax.block_until_ready(saturation_head(pressure, a, n))
    ref = _reference(pressure, a, n)
    assert out.shape == (B, C, H, W) and out.dtype == jnp.float32
    assert bool(jnp.allclose(out, ref, atol=2e-5, rtol=2e-5)), "fast-path mismatch"

    # Test 2: spatially varying a (general path, streams a and n slabs).
    a2 = jax.random.uniform(k3, (1, 1, H, W), minval=0.5, maxval=3.5)
    out2 = jax.block_until_ready(saturation_head(pressure, a2, n))
    ref2 = _reference(pressure, a2, n)
    assert bool(jnp.allclose(out2, ref2, atol=2e-5, rtol=2e-5)), "general-path mismatch"

    # Test 3: bf16 streaming path (bf16 in -> bf16 out, f32 arithmetic inside).
    p_bf = jax.random.uniform(k4, (2, 3, 64, 64),
                              minval=-5.0, maxval=3.0).astype(jnp.bfloat16)
    a_bf = jnp.array([0.8, 1.6, 2.5], jnp.bfloat16).reshape(1, 3, 1, 1)
    n_bf = jnp.array([1.5, 2.0, 2.8], jnp.bfloat16).reshape(1, 3, 1, 1)
    out3 = jax.block_until_ready(saturation_head(p_bf, a_bf, n_bf))
    ref3 = _reference(p_bf.astype(jnp.float32), a_bf.astype(jnp.float32),
                      n_bf.astype(jnp.float32))
    assert out3.dtype == jnp.bfloat16
    assert bool(jnp.allclose(out3.astype(jnp.float32), ref3,
                             atol=2e-2, rtol=2e-2)), "bf16 mismatch"

    # Test 4: spatial size not a multiple of 128 (lane-pad + slice epilogue).
    p4 = jax.random.uniform(k5, (1, 3, 10, 10), minval=-5.0, maxval=3.0)
    a4 = jnp.array([0.7, 1.9, 3.1], jnp.float32).reshape(1, 3, 1, 1)
    n4 = jnp.array([2.0, 1.8, 3.0], jnp.float32).reshape(1, 3, 1, 1)
    out4 = jax.block_until_ready(saturation_head(p4, a4, n4))
    ref4 = _reference(p4, a4, n4)
    assert bool(jnp.allclose(out4, ref4, atol=2e-5, rtol=2e-5)), "lane-pad mismatch"

    # Test 5: ragged trailing block in the general path (rows not divisible).
    p5 = jax.random.uniform(k1, (2, 1, 32, 40), minval=-5.0, maxval=3.0)
    a5 = jax.random.uniform(k2, (1, 1, 32, 40), minval=0.5, maxval=3.5)
    n5 = jnp.float32(2.0)
    out5 = jax.block_until_ready(saturation_head(p5, a5, n5))
    ref5 = _reference(p5, a5, n5)
    assert bool(jnp.allclose(out5, ref5, atol=2e-5, rtol=2e-5)), "ragged mismatch"

    print("KERNEL_OK")
</pallas_src>

<mosaic_0001>
module attributes {stable_mosaic.version = 11 : i64} {
  func.func @_sat_fast_kernel(%arg0: i32, %arg1: i32, %arg2: memref<8xf32, #tpu.memory_space<smem>>, %arg3: memref<8xf32, #tpu.memory_space<smem>>, %arg4: memref<8xf32, #tpu.memory_space<smem>>, %arg5: memref<1x2x128xf32, #tpu.memory_space<vmem>>, %arg6: memref<1x2x128xf32, #tpu.memory_space<vmem>>) attributes {dimension_semantics = [#tpu.dimension_semantics<parallel>, #tpu.dimension_semantics<parallel>], iteration_bounds = array<i64: 8, 1>, scalar_prefetch = 0 : i64, scratch_operands = 0 : i64, tpu.core_type = #tpu.core_type<tc>, window_params = [{transform_indices = @transform_0, window_bounds = array<i64: 8>}, {transform_indices = @transform_1, window_bounds = array<i64: 8>}, {transform_indices = @transform_2, window_bounds = array<i64: 8>}, {transform_indices = @transform_3, window_bounds = array<i64: 1, 2, 128>}, {transform_indices = @transform_4, window_bounds = array<i64: 1, 2, 128>}]} {
    %0 = arith.index_cast %arg0 : i32 to index
    %1 = memref.load %arg2[%0] : memref<8xf32, #tpu.memory_space<smem>>
    %2 = arith.index_cast %arg0 : i32 to index
    %3 = memref.load %arg3[%2] : memref<8xf32, #tpu.memory_space<smem>>
    %4 = arith.index_cast %arg0 : i32 to index
    %5 = memref.load %arg4[%4] : memref<8xf32, #tpu.memory_space<smem>>
    %c0 = arith.constant 0 : index
    %c0_0 = arith.constant 0 : index
    %c0_1 = arith.constant 0 : index
    %6 = vector.load %arg5[%c0, %c0_0, %c0_1] : memref<1x2x128xf32, #tpu.memory_space<vmem>>, vector<1x2x128xf32>
    %7 = vector.broadcast %1 : f32 to vector<1x2x128xf32>
    %8 = arith.mulf %7, %6 : vector<1x2x128xf32>
    %cst = arith.constant 1.000000e+00 : f32
    %9 = vector.broadcast %cst : f32 to vector<1x2x128xf32>
    %10 = arith.subf %9, %8 : vector<1x2x128xf32>
    %cst_2 = arith.constant 0.999899983 : f32
    %11 = vector.broadcast %cst_2 : f32 to vector<1x2x128xf32>
    %12 = arith.divf %11, %10 : vector<1x2x128xf32>
    %cst_3 = arith.constant 9.99999974E-5 : f32
    %13 = vector.broadcast %cst_3 : f32 to vector<1x2x128xf32>
    %14 = arith.addf %12, %13 : vector<1x2x128xf32>
    %cst_4 = arith.constant 0.000000e+00 : f32
    %cst_5 = arith.constant 1.000000e+00 : f32
    %15 = vector.broadcast %cst_4 : f32 to vector<1x2x128xf32>
    %16 = arith.maximumf %15, %14 : vector<1x2x128xf32>
    %17 = vector.broadcast %cst_5 : f32 to vector<1x2x128xf32>
    %18 = arith.minimumf %17, %16 : vector<1x2x128xf32>
    %19 = vector.broadcast %3 : f32 to vector<1x2x128xf32>
    %20 = arith.mulf %19, %12 : vector<1x2x128xf32>
    %cst_6 = arith.constant 9.99999974E-5 : f32
    %21 = vector.broadcast %cst_6 : f32 to vector<1x2x128xf32>
    %22 = arith.subf %21, %20 : vector<1x2x128xf32>
    %cst_7 = arith.constant 0.000000e+00 : f32
    %cst_8 = arith.constant 1.000000e+00 : f32
    %23 = vector.broadcast %cst_7 : f32 to vector<1x2x128xf32>
    %24 = arith.maximumf %23, %22 : vector<1x2x128xf32>
    %25 = vector.broadcast %cst_8 : f32 to vector<1x2x128xf32>
    %26 = arith.minimumf %25, %24 : vector<1x2x128xf32>
    %cst_9 = arith.constant 5.000000e-01 : f32
    %27 = arith.cmpf ogt, %5, %cst_9 : f32
    %cst_10 = arith.constant 1.000000e+00 : f32
    %28 = vector.broadcast %cst_10 : f32 to vector<1x2x128xf32>
    %29 = arith.select %27, %28, %26 : vector<1x2x128xf32>
    %cst_11 = arith.constant 0.000000e+00 : f32
    %30 = vector.broadcast %cst_11 : f32 to vector<1x2x128xf32>
    %31 = arith.cmpf ogt, %10, %30 : vector<1x2x128xf32>
    %cst_12 = arith.constant 0.000000e+00 : f32
    %32 = vector.broadcast %cst_12 : f32 to vector<1x2x128xf32>
    %33 = arith.cmpf olt, %10, %32 : vector<1x2x128xf32>
    %cst_13 = arith.constant 1.000000e+00 : f32
    %34 = vector.broadcast %cst_13 : f32 to vector<1x2x128xf32>
    %35 = arith.select %33, %29, %34 : vector<1x2x128xi1>, vector<1x2x128xf32>
    %36 = arith.select %31, %18, %35 : vector<1x2x128xi1>, vector<1x2x128xf32>
    %c0_14 = arith.constant 0 : index
    %c0_15 = arith.constant 0 : index
    %c0_16 = arith.constant 0 : index
    %37 = vector.load %arg6[%c0_14, %c0_15, %c0_16] : memref<1x2x128xf32, #tpu.memory_space<vmem>>, vector<1x2x128xf32>
    tpu.vector_store %arg6[%c0_14, %c0_15, %c0_16], %36 {strides = array<i32>} : memref<1x2x128xf32, #tpu.memory_space<vmem>>, vector<1x2x128xf32>,
    return
  }
  func.func @transform_0(%arg0: i32, %arg1: i32) -> i32 {
    %c0_i32 = arith.constant 0 : i32
    %c0_i32_0 = arith.constant 0 : i32
    return %c0_i32 : i32
  }
  func.func @transform_1(%arg0: i32, %arg1: i32) -> i32 {
    %c0_i32 = arith.constant 0 : i32
    %c0_i32_0 = arith.constant 0 : i32
    return %c0_i32 : i32
  }
  func.func @transform_2(%arg0: i32, %arg1: i32) -> i32 {
    %c0_i32 = arith.constant 0 : i32
    %c0_i32_0 = arith.constant 0 : i32
    return %c0_i32 : i32
  }
  func.func @transform_3(%arg0: i32, %arg1: i32) -> (i32, i32, i32) {
    %c0_i32 = arith.constant 0 : i32
    %c0_i32_0 = arith.constant 0 : i32
    return %arg0, %arg1, %c0_i32 : i32, i32, i32
  }
  func.func @transform_4(%arg0: i32, %arg1: i32) -> (i32, i32, i32) {
    %c0_i32 = arith.constant 0 : i32
    %c0_i32_0 = arith.constant 0 : i32
    return %arg0, %arg1, %c0_i32 : i32, i32, i32
  }
}

</mosaic_0001>

<llo_original>
// kernel: tpu_custom_call.1
$region0: #{tpu_custom_call.1}
  #allocation0 [shape = 'u32[]', space=smem, size = 0x4, offset = 0x4, fixed_abs, tag = 'smem constant byte address 0x4 - core index']
  #allocation1 [shape = 'u32[144,128]{1,0:T(1,128)}', space=vmem, size = 0x12000, scoped, tag = 'internal scratch']
  %s0 = inlined_call_operand.hbm [shape: f32[8], index: 0, kind: input, shape index: {}]
  %s1 = inlined_call_operand.vmem [shape: f32[8], index: 1, kind: input, shape index: {}]
  %s2 = inlined_call_operand.vmem [shape: f32[8], index: 2, kind: input, shape index: {}]
  %s3 = inlined_call_operand.hbm [shape: f32[8,2,128], index: 3, kind: input, shape index: {}]
  %s4 = inlined_call_operand.hbm [shape: f32[8,2,128], index: 4, kind: output, shape index: {}]
  %s5 = sld [smem:[#allocation0]]
  $region65: #{tpu_custom_call.1} parent=0
    _
  %s7 = ssub.s32 1, %s5
  %s8 = scalar_select 0, %s7, %s5
  $region1: #{tpu_custom_call.1} parent=0
    #allocation2 [shape = 'u8[512]{0}', space=smem, size = 0x200, scoped, tag = 'input window, operand 0, single buffered']
    #allocation3 [shape = 's32[2]{0}', space=sflag, size = 0x8, scoped, tag = 'scoped memory for tpu_custom_call.1']
    #allocation4 [shape = 's32[2]{0}', space=sflag, size = 0x8, scoped, tag = 'scoped memory for tpu_custom_call.1']
    #allocation5 [shape = 's32[2]{0}', space=sflag, size = 0x8, scoped, tag = 'scoped memory for tpu_custom_call.1']
    #allocation6 [shape = 's32[2]{0}', space=sflag, size = 0x8, scoped, tag = 'scoped memory for tpu_custom_call.1']
    #allocation7 [shape = 'u8[512]{0}', space=smem, size = 0x200, scoped, tag = 'input window, operand 1, single buffered']
    #allocation8 [shape = 'u8[512]{0}', space=smem, size = 0x200, scoped, tag = 'input window, operand 2, single buffered']
    #allocation9 [shape = 's32[1]{0}', space=sflag, size = 0x4, scoped, tag = 'scoped memory for tpu_custom_call.1']
    #allocation10 [shape = 'u8[2048]{0}', space=vmem, size = 0x800, scoped, tag = 'input window, operand 3']
    #allocation11 [shape = 'u8[2048]{0}', space=vmem, size = 0x800, scoped, tag = 'output window, operand 0']
    %9 = vsyncpa [#allocation5], 0
    %10 = vsyncpa [#allocation6], 0
    %11 = vsyncpa [#allocation9], 0
    %12 = vsyncpa [#allocation3], 0
    %s13 = scalar_lea.sflag [#allocation3], 1
    %14 = vsyncpa %s13, 0
    %15 = vsyncpa [#allocation4], 0
    %s16 = scalar_lea.sflag [#allocation4], 1
    %17 = vsyncpa %s16, 0
    loop: start=0, step=1, limit=10
    $region2: #{tpu_custom_call.1} parent=1 // loop_pre_header
      _
    $region3: #{tpu_custom_call.1} parent=1 // loop_header
      %s19 = sphi 0, %s23
      %p20 = scmp.ge.s32.totalorder %s19, 10
      %s26 = sphi 0, %s38
      %s27 = sphi 0, %s34
      %s28 = sphi 0, %s26
      %s29 = sphi 0, %s27
      %s30 = sphi 0, %s28
      %s31 = sphi 0, %s29
      %s39 = sphi 0, %s39
      %s41 = sphi 0, %s39
      %s42 = sphi 0, %s41
      %s56 = sphi 0, %s42
      %s60 = sphi 0, %s60
      %s62 = sphi 0, %s60
      %s63 = sphi 0, %s62
      %s77 = sphi 0, %s63
      %s81 = sphi 0, %s81
      %s83 = sphi 0, %s81
      %s84 = sphi 0, %s83
      %s98 = sphi 0, %s84
      %s106 = sphi 0, %s108
      %s109 = sphi 0, %s106
      %s110 = sphi 0, %s109
      %s126 = sphi 0, %s110
      %s134 = sphi 0, %s136
      %s137 = sphi 0, %s134
      %s138 = sphi 0, %s137
      %s154 = sphi 0, %s138
    $region4: #{tpu_custom_call.1} parent=1 // loop_header_branch
      %22 = sbr.rel (%p20) target = $region8
    $region5: #{tpu_custom_call.1} parent=1 // loop_body
      %s24 = ssub.s32 %s19, 1
      %s25 = ssub.s32 %s19, 2
      %s32 = sadd.s32 1, %s27
      %p33 = scmp.ge.s32.totalorder %s32, 1
      %s34 = scalar_select %p33, 0, %s32
      %s35 = sadd.s32 1, %s26
      %s36 = scalar_select %p33, %s35, %s26
      %p37 = scmp.ge.s32.totalorder %s36, 8
      %s38 = scalar_select %p37, 0, %s36
      %s40 = sadd.s32 %s39, 1
      %p43 = scmp.eq.s32.totalorder %s19, 7
      %p44 = scmp.ne.s32.totalorder %s39, %s41
      %p45 = scmp.eq.s32.totalorder %s19, 0
      %p46 = por %p44, %p45
      %p47 = scmp.ne.s32.totalorder %s39, %s41
      %p48 = scmp.eq.s32.totalorder %s24, 7
      %p49 = por %p47, %p48
      %p50 = scmp.ne.s32.totalorder %s41, %s42
      %p51 = scmp.eq.s32.totalorder %s24, 0
      %p52 = por %p50, %p51
      %p53 = scmp.ne.s32.totalorder %s41, %s42
      %p54 = scmp.eq.s32.totalorder %s25, 7
      %p55 = por %p53, %p54
      %p57 = scmp.ne.s32.totalorder %s42, %s56
      %p58 = scmp.eq.s32.totalorder %s25, 0
      %p59 = por %p57, %p58
      %s61 = sadd.s32 %s60, 1
      %p64 = scmp.eq.s32.totalorder %s19, 7
      %p65 = scmp.ne.s32.totalorder %s60, %s62
      %p66 = scmp.eq.s32.totalorder %s19, 0
      %p67 = por %p65, %p66
      %p68 = scmp.ne.s32.totalorder %s60, %s62
      %p69 = scmp.eq.s32.totalorder %s24, 7
      %p70 = por %p68, %p69
      %p71 = scmp.ne.s32.totalorder %s62, %s63
      %p72 = scmp.eq.s32.totalorder %s24, 0
      %p73 = por %p71, %p72
      %p74 = scmp.ne.s32.totalorder %s62, %s63
      %p75 = scmp.eq.s32.totalorder %s25, 7
      %p76 = por %p74, %p75
      %p78 = scmp.ne.s32.totalorder %s63, %s77
      %p79 = scmp.eq.s32.totalorder %s25, 0
      %p80 = por %p78, %p79
      %s82 = sadd.s32 %s81, 1
      %p85 = scmp.eq.s32.totalorder %s19, 7
      %p86 = scmp.ne.s32.totalorder %s81, %s83
      %p87 = scmp.eq.s32.totalorder %s19, 0
      %p88 = por %p86, %p87
      %p89 = scmp.ne.s32.totalorder %s81, %s83
      %p90 = scmp.eq.s32.totalorder %s24, 7
      %p91 = por %p89, %p90
      %p92 = scmp.ne.s32.totalorder %s83, %s84
      %p93 = scmp.eq.s32.totalorder %s24, 0
      %p94 = por %p92, %p93
      %p95 = scmp.ne.s32.totalorder %s83, %s84
      %p96 = scmp.eq.s32.totalorder %s25, 7
      %p97 = por %p95, %p96
      %p99 = scmp.ne.s32.totalorder %s84, %s98
      %p100 = scmp.eq.s32.totalorder %s25, 0
      %p101 = por %p99, %p100
      %s102 = ssub.s32 %s26, %s38
      %s103 = ssub.s32 %s27, %s34
      %s104 = sor.u32 %s102, %s103
      %p105 = scmp.eq.s32.totalorder %s104, 0
      %s107 = sadd.s32 %s106, 1
      %s108 = scalar_select %p105, %s106, %s107
      %p111 = pneg %p105
      %p112 = scmp.eq.s32.totalorder %s19, 7
      %p113 = por %p111, %p112
      %p114 = scmp.ne.s32.totalorder %s106, %s109
      %p115 = scmp.eq.s32.totalorder %s19, 0
      %p116 = por %p114, %p115
      %p117 = scmp.ne.s32.totalorder %s106, %s109
      %p118 = scmp.eq.s32.totalorder %s24, 7
      %p119 = por %p117, %p118
      %p120 = scmp.ne.s32.totalorder %s109, %s110
      %p121 = scmp.eq.s32.totalorder %s24, 0
      %p122 = por %p120, %p121
      %p123 = scmp.ne.s32.totalorder %s109, %s110
      %p124 = scmp.eq.s32.totalorder %s25, 7
      %p125 = por %p123, %p124
      %p127 = scmp.ne.s32.totalorder %s110, %s126
      %p128 = scmp.eq.s32.totalorder %s25, 0
      %p129 = por %p127, %p128
      %s130 = ssub.s32 %s26, %s38
      %s131 = ssub.s32 %s27, %s34
      %s132 = sor.u32 %s130, %s131
      %p133 = scmp.eq.s32.totalorder %s132, 0
      %s135 = sadd.s32 %s134, 1
      %s136 = scalar_select %p133, %s134, %s135
      %p139 = pneg %p133
      %p140 = scmp.eq.s32.totalorder %s19, 7
      %p141 = por %p139, %p140
      %p142 = scmp.ne.s32.totalorder %s134, %s137
      %p143 = scmp.eq.s32.totalorder %s19, 0
      %p144 = por %p142, %p143
      %p145 = scmp.ne.s32.totalorder %s134, %s137
      %p146 = scmp.eq.s32.totalorder %s24, 7
      %p147 = por %p145, %p146
      %p148 = scmp.ne.s32.totalorder %s137, %s138
      %p149 = scmp.eq.s32.totalorder %s24, 0
      %p150 = por %p148, %p149
      %p151 = scmp.ne.s32.totalorder %s137, %s138
      %p152 = scmp.eq.s32.totalorder %s25, 7
      %p153 = por %p151, %p152
      %p155 = scmp.ne.s32.totalorder %s138, %s154
      %p156 = scmp.eq.s32.totalorder %s25, 0
      %p157 = por %p155, %p156
      %p158 = scmp.le.s32.totalorder 1, %s19
      %p159 = scmp.lt.s32.totalorder %s19, 9
      %p160 = pnand %p158, %p159
      %p161 = pneg %p160
      // Predicated region
      $region9: #{tpu_custom_call.1} parent=5 // pred_check
        _
      $region10: #{tpu_custom_call.1} parent=5 // pred_check_branch
        %163 = sbr.rel (%p160) target = $region12
      $region11: #{tpu_custom_call.1} parent=5 // pred_region
        %s164 = ssub.s32 %s19, 1
        // Predicated region
        $region13: #{tpu_custom_call.1} parent=11 // pred_check
          %p165 = pneg %p52
        $region14: #{tpu_custom_call.1} parent=11 // pred_check_branch
          %167 = sbr.rel (%p165) target = $region16
        $region15: #{tpu_custom_call.1} parent=11 // pred_region
          %s169 = ssub.s32 16, 16
          %170 = vsyncadd [#allocation5], %s169
          %173 = dma.hbm_to_smem %s0, 16, [#allocation2], [#allocation5]
        $region16: #{tpu_custom_call.1} parent=11 // pred_fallthru
          _
        // Predicated region
        $region17: #{tpu_custom_call.1} parent=11 // pred_check
          %p174 = pneg %p73
        $region18: #{tpu_custom_call.1} parent=11 // pred_check_branch
          %176 = sbr.rel (%p174) target = $region20
        $region19: #{tpu_custom_call.1} parent=11 // pred_region
          %s178 = ssub.s32 16, 16
          %179 = vsyncadd [#allocation6], %s178
          %s181 = sshll.u32 %s1, 4
          %s182 = int_to_ptr.vmem [resolvable:$true] %s181
          %184 = dma.vmem_to_smem %s182, 16, [#allocation7], [#allocation6]
        $region20: #{tpu_custom_call.1} parent=11 // pred_fallthru
          _
        // Predicated region
        $region21: #{tpu_custom_call.1} parent=11 // pred_check
          %p185 = pneg %p94
        $region22: #{tpu_custom_call.1} parent=11 // pred_check_branch
          %187 = sbr.rel (%p185) target = $region24
        $region23: #{tpu_custom_call.1} parent=11 // pred_region
          %s189 = ssub.s32 16, 16
          %190 = vsyncadd [#allocation9], %s189
          %s192 = sshll.u32 %s2, 4
          %s193 = int_to_ptr.vmem [resolvable:$true] %s192
          %195 = dma.vmem_to_smem %s193, 16, [#allocation8], [#allocation9]
        $region24: #{tpu_custom_call.1} parent=11 // pred_fallthru
          _
      $region12: #{tpu_custom_call.1} parent=5 // pred_fallthru
        _
      %p196 = scmp.lt.s32.totalorder %s19, 8
      // Predicated region
      $region25: #{tpu_custom_call.1} parent=5 // pred_check
        %p197 = pneg %p196
      $region26: #{tpu_custom_call.1} parent=5 // pred_check_branch
        %199 = sbr.rel (%p197) target = $region28
      $region27: #{tpu_custom_call.1} parent=5 // pred_region
        // Predicated region
        $region29: #{tpu_custom_call.1} parent=27 // pred_check
          %p200 = pneg %p116
        $region30: #{tpu_custom_call.1} parent=27 // pred_check_branch
          %202 = sbr.rel (%p200) target = $region32
        $region31: #{tpu_custom_call.1} parent=27 // pred_region
          %s203 = sand.u32 %s106, 1
          %s204 = scalar_lea.sflag [#allocation3], %s203
          %s205 = sand.u32 %s106, 1
          %s206 = smul.addr %s205, 2
          %s207 = scalar_lea.vmem [#allocation10], %s206
          %s209 = ssub.s32 32, 32
          %210 = vsyncadd %s204, %s209
          %s211 = sadd.s32 %s27, %s26
          %s212 = smul.addr %s211, 32
          %s213 = scalar_lea.hbm %s3, %s212
          %s215 = sshll.u32 %s207, 4
          %s216 = int_to_ptr.vmem [resolvable:$true] %s215
          %218 = dma.hbm_to_vmem [thread:$0]  %s213, 32, %s216, %s204
        $region32: #{tpu_custom_call.1} parent=27 // pred_fallthru
          _
      $region28: #{tpu_custom_call.1} parent=5 // pred_fallthru
        _
      %p219 = scmp.le.s32.totalorder 1, %s19
      %p220 = scmp.lt.s32.totalorder %s19, 9
      %p221 = pnand %p219, %p220
      %p222 = pneg %p221
      // Predicated region
      $region33: #{tpu_custom_call.1} parent=5 // pred_check
        _
      $region34: #{tpu_custom_call.1} parent=5 // pred_check_branch
        %224 = sbr.rel (%p221) target = $region36
      $region35: #{tpu_custom_call.1} parent=5 // pred_region
        %s225 = ssub.s32 %s19, 1
        // Predicated region
        $region37: #{tpu_custom_call.1} parent=35 // pred_check
          %p226 = pneg %p52
        $region38: #{tpu_custom_call.1} parent=35 // pred_check_branch
          %228 = sbr.rel (%p226) target = $region40
        $region39: #{tpu_custom_call.1} parent=35 // pred_region
          %229 = dma.done [#allocation5], 16
        $region40: #{tpu_custom_call.1} parent=35 // pred_fallthru
          _
        // Predicated region
        $region41: #{tpu_custom_call.1} parent=35 // pred_check
          %p230 = pneg %p73
        $region42: #{tpu_custom_call.1} parent=35 // pred_check_branch
          %232 = sbr.rel (%p230) target = $region44
        $region43: #{tpu_custom_call.1} parent=35 // pred_region
          %233 = dma.done [#allocation6], 16
        $region44: #{tpu_custom_call.1} parent=35 // pred_fallthru
          _
        // Predicated region
        $region45: #{tpu_custom_call.1} parent=35 // pred_check
          %p234 = pneg %p94
        $region46: #{tpu_custom_call.1} parent=35 // pred_check_branch
          %236 = sbr.rel (%p234) target = $region48
        $region47: #{tpu_custom_call.1} parent=35 // pred_region
          %237 = dma.done [#allocation9], 16
        $region48: #{tpu_custom_call.1} parent=35 // pred_fallthru
          _
        %s238 = sand.u32 %s109, 1
        %s239 = scalar_lea.sflag [#allocation3], %s238
        %s240 = sand.u32 %s109, 1
        %s241 = smul.addr %s240, 2
        %s242 = scalar_lea.vmem [#allocation10], %s241
        // Predicated region
        $region49: #{tpu_custom_call.1} parent=35 // pred_check
          %p243 = pneg %p122
        $region50: #{tpu_custom_call.1} parent=35 // pred_check_branch
          %245 = sbr.rel (%p243) target = $region52
        $region51: #{tpu_custom_call.1} parent=35 // pred_region
          %246 = dma.done %s239, 32
        $region52: #{tpu_custom_call.1} parent=35 // pred_fallthru
          _
        %247 = sfence
        %p248 = pneg %p52
        %p249 = pneg %p49
        %p250 = pneg %p73
        %p251 = pneg %p70
        %p252 = pneg %p94
        %p253 = pneg %p91
        %s254 = sand.u32 %s109, 1
        %s255 = scalar_lea.sflag [#allocation3], %s254
        %s256 = sand.u32 %s109, 1
        %s257 = smul.addr %s256, 2
        %s258 = scalar_lea.vmem [#allocation10], %s257
        %p259 = pneg %p122
        %p260 = pneg %p119
        %p261 = pneg %p150
        %p262 = pneg %p147
        %s263 = sand.u32 %s137, 1
        %s264 = scalar_lea.sflag [#allocation4], %s263
        %s265 = sand.u32 %s137, 1
        %s266 = smul.addr %s265, 2
        %s267 = scalar_lea.vmem [#allocation11], %s266
        %s268 = sld [smem:[#allocation2 + %s28]]
        %s269 = sld [smem:[#allocation7 + %s28]]
        %s270 = sld [smem:[#allocation8 + %s28]]
        %v271 = vld [vmem:[%s242] sm:$0x3]
        %v272 = vstv %s268
        %v273 = vmul.f32 %v272, %v271
        %v274 = vsub.f32 1.0, %v273
        %v275 = vrcp.pop %v274
        %v276 = vmul.f32 0.9999, %v275
        %v277 = vadd.f32 %v276, 0.0001
        %v278 = vmax.f32 %v277, 0.0
        %v279 = vmin.f32 %v278, 1.0
        %v280 = vstv %s269
        %v281 = vmul.f32 %v280, %v276
        %v282 = vsub.f32 0.0001, %v281
        %v283 = vmax.f32 %v282, 0.0
        %v284 = vmin.f32 %v283, 1.0
        %p285 = scmp.gt.f32.partialorder %s270, 0.5
        %s286 = scalar_select %p285, 1, 0
        %v287 = vstv %s286
        %vm288 = vcmp.eq.s32.totalorder %v287, 1
        %v289 = vsel %vm288, 1.0, %v284
        %vm290 = vcmp.gt.f32.partialorder %v274, 0.0
        %vm291 = vcmp.lt.f32.partialorder %v274, 0.0
        %v292 = vsel %vm291, %v289, 1.0
        %v293 = vsel %vm290, %v279, %v292
        %294 = vst [vmem:[%s267] sm:$0x3] %v293
        %s295 = sand.u32 %s137, 1
        %s296 = scalar_lea.sflag [#allocation4], %s295
        %s297 = sand.u32 %s137, 1
        %s298 = smul.addr %s297, 2
        %s299 = scalar_lea.vmem [#allocation11], %s298
        // Predicated region
        $region53: #{tpu_custom_call.1} parent=35 // pred_check
          %p300 = pneg %p147
        $region54: #{tpu_custom_call.1} parent=35 // pred_check_branch
          %302 = sbr.rel (%p300) target = $region56
        $region55: #{tpu_custom_call.1} parent=35 // pred_region
          %s304 = ssub.s32 32, 32
          %305 = vsyncadd %s296, %s304
          %s306 = sadd.s32 %s29, %s28
          %s307 = smul.addr %s306, 32
          %s308 = scalar_lea.hbm %s4, %s307
          %s310 = sshll.u32 %s299, 4
          %s311 = int_to_ptr.vmem [resolvable:$true] %s310
          %313 = dma.vmem_to_hbm [thread:$0]  %s311, 32, %s308, %s296
        $region56: #{tpu_custom_call.1} parent=35 // pred_fallthru
          _
      $region36: #{tpu_custom_call.1} parent=5 // pred_fallthru
        _
      %p314 = scmp.le.s32.totalorder 2, %s19
      // Predicated region
      $region57: #{tpu_custom_call.1} parent=5 // pred_check
        %p315 = pneg %p314
      $region58: #{tpu_custom_call.1} parent=5 // pred_check_branch
        %317 = sbr.rel (%p315) target = $region60
      $region59: #{tpu_custom_call.1} parent=5 // pred_region
        %s318 = ssub.s32 %s19, 2
        // Predicated region
        $region61: #{tpu_custom_call.1} parent=59 // pred_check
          %p319 = pneg %p153
        $region62: #{tpu_custom_call.1} parent=59 // pred_check_branch
          %321 = sbr.rel (%p319) target = $region64
        $region63: #{tpu_custom_call.1} parent=59 // pred_region
          %s322 = sand.u32 %s138, 1
          %s323 = scalar_lea.sflag [#allocation4], %s322
          %s324 = sand.u32 %s138, 1
          %s325 = smul.addr %s324, 2
          %s326 = scalar_lea.vmem [#allocation11], %s325
          %327 = dma.done %s323, 32
        $region64: #{tpu_custom_call.1} parent=59 // pred_fallthru
          _
      $region60: #{tpu_custom_call.1} parent=5 // pred_fallthru
        _
    $region6: #{tpu_custom_call.1} parent=1 // loop_footer
      %s23 = sadd.s32 1, %s19
    $region7: #{tpu_custom_call.1} parent=1 // loop_footer_branch
      %18 = sbr.rel target = $region3
    $region8: #{tpu_custom_call.1} parent=1 // loop_exit
      _
    %328 = vsyncpa [#allocation3], 1
    %s329 = scalar_lea.sflag [#allocation3], 1
    %330 = vsyncpa %s329, 1
    %331 = vsyncpa [#allocation4], 1
    %s332 = scalar_lea.sflag [#allocation4], 1
    %333 = vsyncpa %s332, 1
    %334 = vsyncpa [#allocation5], 1
    %s335 = scalar_lea.sflag [#allocation5], 1
    %336 = vsyncpa %s335, 1
    %337 = vsyncpa [#allocation6], 1
    %s338 = scalar_lea.sflag [#allocation6], 1
    %339 = vsyncpa %s338, 1
    %340 = vsyncpa [#allocation9], 1

</llo_original>
